<compile_context>
chip_gen: v5e
topology: v5e:2x2
jax: 0.10.0
libtpu: 0.0.40
codegen_flags: <defaults>
</compile_context>

<pallas_src>
import functools
import math

import jax
import jax.numpy as jnp
from jax.experimental import pallas as pl
from jax.experimental.pallas import tpu as pltpu


# ----------------------------------------------------------------------------
# Fused kernel: one grid step does the whole forward pass for all batches.
# ----------------------------------------------------------------------------
def _mha_fused_kernel(x_ref, bias_ref, wqkv_ref, bqkv_ref, wo_ref, bo_ref,
                      o_ref, *, batch, seq, num_heads, d_k, d_model):
    def mm_nt(x, w):
        # x: (M, K), w: (Nout, K) in PyTorch (out, in) layout -> x @ w.T ;
        # contraction on the LAST dim of both operands (no explicit transpose).
        return jax.lax.dot_general(
            x, w, dimension_numbers=(((1,), (1,)), ((), ())),
            preferred_element_type=jnp.float32)

    # --- fused QKV projection: one MXU pass for all of Q, K, V, all batches
    proj = mm_nt(x_ref[...], wqkv_ref[...]) + bqkv_ref[...]      # (B*N, 3D) f32

    scale = 1.0 / math.sqrt(d_k)
    # fold 1/sqrt(d_k) into q once; cast projections to bf16 for the MXU.
    q_all = (proj[:, 0:d_model] * scale).astype(jnp.bfloat16)    # (B*N, D)
    k_all = proj[:, d_model:2 * d_model].astype(jnp.bfloat16)
    v_all = proj[:, 2 * d_model:3 * d_model].astype(jnp.bfloat16)

    wo = wo_ref[...]                                             # (D, D) bf16

    # Score / softmax / PV / per-head output-projection accumulation.
    # Static unroll over batch x heads (heads are contiguous lane slices,
    # no reshape/transpose, no concat).
    for b in range(batch):
        r0 = b * seq
        out_b = jnp.zeros((seq, d_model), jnp.float32)
        for h in range(num_heads):
            lo, hi = h * d_k, (h + 1) * d_k
            qh = q_all[r0:r0 + seq, lo:hi]                       # (N, d_k)
            kh = k_all[r0:r0 + seq, lo:hi]
            vh = v_all[r0:r0 + seq, lo:hi]

            s = mm_nt(qh, kh) + bias_ref[b, h].astype(jnp.float32)  # (N, N)
            # TODO(synk): optional mask (masked_fill == 0 -> -1e9) not wired.
            s = s - jnp.max(s, axis=-1, keepdims=True)
            p = jnp.exp(s)
            p = p / jnp.sum(p, axis=-1, keepdims=True)           # exact divide

            ctx = jnp.dot(p.astype(jnp.bfloat16), vh,
                          preferred_element_type=jnp.float32)    # (N, d_k)
            # per-head accumulation of the output projection (no concat,
            # rides the MXU f32 accumulator).
            out_b = out_b + mm_nt(ctx.astype(jnp.bfloat16), wo[:, lo:hi])

        o_ref[r0:r0 + seq, :] = (out_b + bo_ref[...]).astype(o_ref.dtype)


# ----------------------------------------------------------------------------
# Wrapper: single pallas_call, single grid step, whole problem in VMEM.
# ----------------------------------------------------------------------------
def multi_headed_attention_forward(params, query, key, value, attention_bias,
                                   h):
    B, N, D = query.shape
    assert D % h == 0
    d_k = D // h
    H = h
    f32, bf16 = jnp.float32, jnp.bfloat16

    # Fold batch into matmul rows and fuse Q/K/V into ONE matmul:
    # x_cat columns are [xq | xk | xv]; w_qkv is block-diagonal in (out, in)
    # layout so x_cat @ w_qkv.T == [xq@wq.T | xk@wk.T | xv@wv.T].
    # (In real use the fused weight would be built once, not per call.)
    xq = query.reshape(B * N, D)
    xk = key.reshape(B * N, D)
    xv = value.reshape(B * N, D)
    x_cat = jnp.concatenate([xq, xk, xv], axis=-1).astype(bf16)      # (B*N, 3D)

    w_qkv = jax.scipy.linalg.block_diag(
        params["wq"], params["wk"], params["wv"]).astype(bf16)       # (3D, 3D)
    b_qkv = jnp.concatenate(
        [params["bq"], params["bk"], params["bv"]]).reshape(1, 3 * D).astype(f32)

    wo = params["wo"].astype(bf16)                                   # (D, D)
    bo = params["bo"].reshape(1, D).astype(f32)
    bias = attention_bias.astype(bf16)                               # (B,H,N,N)

    kernel = functools.partial(_mha_fused_kernel, batch=B, seq=N,
                               num_heads=H, d_k=d_k, d_model=D)

    def full(shape):
        nd = len(shape)
        return pl.BlockSpec(shape, lambda i, _nd=nd: (0,) * _nd)

    out = pl.pallas_call(
        kernel,
        out_shape=jax.ShapeDtypeStruct((B * N, D), f32),
        grid=(1,),                                  # one step: no per-batch
        in_specs=[                                  # pipeline overhead
            full((B * N, 3 * D)),                   # x_cat
            full((B, H, N, N)),                     # attention bias (bf16)
            full((3 * D, 3 * D)),                   # fused block-diag W_qkv
            full((1, 3 * D)),                       # fused bias
            full((D, D)),                           # W_out
            full((1, D)),                           # b_out
        ],
        out_specs=full((B * N, D)),
        compiler_params=pltpu.CompilerParams(
            dimension_semantics=("arbitrary",)),    # no megacore split of a
    )(x_cat, bias, w_qkv, b_qkv, wo, bo)            # sub-microsecond step

    return out.reshape(B, N, D)                     # metadata-only reshape


# ----------------------------------------------------------------------------
# Pure-JAX f32 reference (the PyTorch module's math) for correctness check.
# ----------------------------------------------------------------------------
def reference_forward(params, query, key, value, attention_bias, h):
    B, N, D = query.shape
    d_k = D // h

    def lin(x, w, b):
        return x @ w.T + b

    def split(x):
        return x.reshape(B, N, h, d_k).transpose(0, 2, 1, 3)

    q = split(lin(query, params["wq"], params["bq"]))
    k = split(lin(key, params["wk"], params["bk"]))
    v = split(lin(value, params["wv"], params["bv"]))
    scores = jnp.einsum("bhij,bhkj->bhik", q, k) / math.sqrt(d_k)
    scores = scores + attention_bias
    p = jax.nn.softmax(scores, axis=-1)
    x = jnp.einsum("bhik,bhkd->bhid", p, v)
    x = x.transpose(0, 2, 1, 3).reshape(B, N, D)
    return lin(x, params["wo"], params["bo"])


if __name__ == "__main__":
    # Small shapes consistent with the module: h=4 heads, d_model=32 -> d_k=8
    B, N, H, D_MODEL = 2, 8, 4, 32

    key0 = jax.random.PRNGKey(0)
    keys = jax.random.split(key0, 12)
    scale = 1.0 / math.sqrt(D_MODEL)

    params = {
        "wq": jax.random.normal(keys[0], (D_MODEL, D_MODEL), jnp.float32) * scale,
        "bq": jax.random.normal(keys[1], (D_MODEL,), jnp.float32) * 0.01,
        "wk": jax.random.normal(keys[2], (D_MODEL, D_MODEL), jnp.float32) * scale,
        "bk": jax.random.normal(keys[3], (D_MODEL,), jnp.float32) * 0.01,
        "wv": jax.random.normal(keys[4], (D_MODEL, D_MODEL), jnp.float32) * scale,
        "bv": jax.random.normal(keys[5], (D_MODEL,), jnp.float32) * 0.01,
        "wo": jax.random.normal(keys[6], (D_MODEL, D_MODEL), jnp.float32) * scale,
        "bo": jax.random.normal(keys[7], (D_MODEL,), jnp.float32) * 0.01,
    }

    query = jax.random.normal(keys[8], (B, N, D_MODEL), jnp.float32)
    key_in = jax.random.normal(keys[9], (B, N, D_MODEL), jnp.float32)
    value = jax.random.normal(keys[10], (B, N, D_MODEL), jnp.float32)
    attention_bias = jax.random.normal(keys[11], (B, H, N, N), jnp.float32) * 0.1

    out = multi_headed_attention_forward(
        params, query, key_in, value, attention_bias, h=H)
    out = jax.block_until_ready(out)

    ref = reference_forward(params, query, key_in, value, attention_bias, h=H)
    assert out.shape == (B, N, D_MODEL)
    # Tolerance accounts for bf16 MXU operands (weights/activations cast at
    # the pallas_call boundary); the f32 reference is the module's exact math.
    assert jnp.allclose(out, ref, atol=5e-2, rtol=5e-2), "mismatch vs reference"

    print("KERNEL_OK")
</pallas_src>

<mosaic_0001>
module attributes {stable_mosaic.version = 11 : i64} {
  func.func @_mha_fused_kernel(%arg0: i32, %arg1: memref<16x96xbf16, #tpu.memory_space<vmem>>, %arg2: memref<2x4x8x8xbf16, #tpu.memory_space<vmem>>, %arg3: memref<96x96xbf16, #tpu.memory_space<vmem>>, %arg4: memref<1x96xf32, #tpu.memory_space<vmem>>, %arg5: memref<32x32xbf16, #tpu.memory_space<vmem>>, %arg6: memref<1x32xf32, #tpu.memory_space<vmem>>, %arg7: memref<16x32xf32, #tpu.memory_space<vmem>>) attributes {dimension_semantics = [#tpu.dimension_semantics<arbitrary>], iteration_bounds = array<i64: 1>, scalar_prefetch = 0 : i64, scratch_operands = 0 : i64, tpu.core_type = #tpu.core_type<tc>, window_params = [{pipeline_mode = #tpu.pipeline_mode<synchronous>, transform_indices = @transform_0, window_bounds = array<i64: 16, 96>}, {pipeline_mode = #tpu.pipeline_mode<synchronous>, transform_indices = @transform_1, window_bounds = array<i64: 2, 4, 8, 8>}, {pipeline_mode = #tpu.pipeline_mode<synchronous>, transform_indices = @transform_2, window_bounds = array<i64: 96, 96>}, {pipeline_mode = #tpu.pipeline_mode<synchronous>, transform_indices = @transform_3, window_bounds = array<i64: 1, 96>}, {pipeline_mode = #tpu.pipeline_mode<synchronous>, transform_indices = @transform_4, window_bounds = array<i64: 32, 32>}, {pipeline_mode = #tpu.pipeline_mode<synchronous>, transform_indices = @transform_5, window_bounds = array<i64: 1, 32>}, {pipeline_mode = #tpu.pipeline_mode<synchronous>, transform_indices = @transform_6, window_bounds = array<i64: 16, 32>}]} {
    %c0 = arith.constant 0 : index
    %c0_0 = arith.constant 0 : index
    %0 = vector.load %arg1[%c0, %c0_0] : memref<16x96xbf16, #tpu.memory_space<vmem>>, vector<16x96xbf16>
    %c0_1 = arith.constant 0 : index
    %c0_2 = arith.constant 0 : index
    %1 = vector.load %arg3[%c0_1, %c0_2] : memref<96x96xbf16, #tpu.memory_space<vmem>>, vector<96x96xbf16>
    %cst = arith.constant dense<0.000000e+00> : vector<16x96xf32>
    %2 = tpu.matmul %0, %1, %cst {dimension_numbers = #tpu.dot_dimension_numbers<[1], [1], [0], [0], [0, 0, 1, 0], [], []>} : vector<16x96xbf16>, vector<96x96xbf16>, vector<16x96xf32> -> vector<16x96xf32>
    %c0_3 = arith.constant 0 : index
    %c0_4 = arith.constant 0 : index
    %3 = vector.load %arg4[%c0_3, %c0_4] : memref<1x96xf32, #tpu.memory_space<vmem>>, vector<1x96xf32>
    %4 = vector.broadcast %3 : vector<1x96xf32> to vector<16x96xf32>
    %5 = arith.addf %2, %4 : vector<16x96xf32>
    %6 = vector.extract_strided_slice %5 {offsets = [0, 0], sizes = [16, 32], strides = [1, 1]} : vector<16x96xf32> to vector<16x32xf32>
    %cst_5 = arith.constant 0.353553385 : f32
    %7 = vector.broadcast %cst_5 : f32 to vector<16x32xf32>
    %8 = arith.mulf %6, %7 : vector<16x32xf32>
    %9 = arith.truncf %8 : vector<16x32xf32> to vector<16x32xbf16>
    %10 = vector.extract_strided_slice %5 {offsets = [0, 32], sizes = [16, 32], strides = [1, 1]} : vector<16x96xf32> to vector<16x32xf32>
    %11 = arith.truncf %10 : vector<16x32xf32> to vector<16x32xbf16>
    %12 = vector.extract_strided_slice %5 {offsets = [0, 64], sizes = [16, 32], strides = [1, 1]} : vector<16x96xf32> to vector<16x32xf32>
    %13 = arith.truncf %12 : vector<16x32xf32> to vector<16x32xbf16>
    %c0_6 = arith.constant 0 : index
    %c0_7 = arith.constant 0 : index
    %14 = vector.load %arg5[%c0_6, %c0_7] : memref<32x32xbf16, #tpu.memory_space<vmem>>, vector<32x32xbf16>
    %cst_8 = arith.constant 0.000000e+00 : f32
    %15 = vector.broadcast %cst_8 : f32 to vector<8x32xf32>
    %16 = vector.extract_strided_slice %9 {offsets = [0, 0], sizes = [8, 8], strides = [1, 1]} : vector<16x32xbf16> to vector<8x8xbf16>
    %17 = vector.extract_strided_slice %11 {offsets = [0, 0], sizes = [8, 8], strides = [1, 1]} : vector<16x32xbf16> to vector<8x8xbf16>
    %18 = vector.extract_strided_slice %13 {offsets = [0, 0], sizes = [8, 8], strides = [1, 1]} : vector<16x32xbf16> to vector<8x8xbf16>
    %cst_9 = arith.constant dense<0.000000e+00> : vector<8x8xf32>
    %19 = tpu.matmul %16, %17, %cst_9 {dimension_numbers = #tpu.dot_dimension_numbers<[1], [1], [0], [0], [0, 0, 1, 0], [], []>} : vector<8x8xbf16>, vector<8x8xbf16>, vector<8x8xf32> -> vector<8x8xf32>
    %c0_10 = arith.constant 0 : index
    %c0_11 = arith.constant 0 : index
    %c0_12 = arith.constant 0 : index
    %c0_13 = arith.constant 0 : index
    %20 = vector.load %arg2[%c0_10, %c0_11, %c0_12, %c0_13] : memref<2x4x8x8xbf16, #tpu.memory_space<vmem>>, vector<1x1x8x8xbf16>
    %21 = vector.shape_cast %20 : vector<1x1x8x8xbf16> to vector<8x8xbf16>
    %22 = arith.extf %21 : vector<8x8xbf16> to vector<8x8xf32>
    %23 = arith.addf %19, %22 : vector<8x8xf32>
    %cst_14 = arith.constant dense<0xFF800000> : vector<8xf32>
    %24 = vector.multi_reduction <maximumf>, %23, %cst_14 [1] : vector<8x8xf32> to vector<8xf32>
    %25 = vector.shape_cast %24 : vector<8xf32> to vector<8x1xf32>
    %26 = vector.broadcast %25 : vector<8x1xf32> to vector<8x8xf32>
    %27 = arith.subf %23, %26 : vector<8x8xf32>
    %28 = math.exp %27 : vector<8x8xf32>
    %cst_15 = arith.constant dense<0.000000e+00> : vector<8xf32>
    %29 = vector.multi_reduction <add>, %28, %cst_15 [1] : vector<8x8xf32> to vector<8xf32>
    %30 = vector.shape_cast %29 : vector<8xf32> to vector<8x1xf32>
    %31 = vector.broadcast %30 : vector<8x1xf32> to vector<8x8xf32>
    %32 = arith.divf %28, %31 : vector<8x8xf32>
    %33 = arith.truncf %32 : vector<8x8xf32> to vector<8x8xbf16>
    %cst_16 = arith.constant dense<0.000000e+00> : vector<8x8xf32>
    %34 = tpu.matmul %33, %18, %cst_16 {dimension_numbers = #tpu.dot_dimension_numbers<[1], [0], [0], [1], [0, 0, 1, 1], [], []>} : vector<8x8xbf16>, vector<8x8xbf16>, vector<8x8xf32> -> vector<8x8xf32>
    %35 = arith.truncf %34 : vector<8x8xf32> to vector<8x8xbf16>
    %36 = vector.extract_strided_slice %14 {offsets = [0, 0], sizes = [32, 8], strides = [1, 1]} : vector<32x32xbf16> to vector<32x8xbf16>
    %cst_17 = arith.constant dense<0.000000e+00> : vector<8x32xf32>
    %37 = tpu.matmul %35, %36, %cst_17 {dimension_numbers = #tpu.dot_dimension_numbers<[1], [1], [0], [0], [0, 0, 1, 0], [], []>} : vector<8x8xbf16>, vector<32x8xbf16>, vector<8x32xf32> -> vector<8x32xf32>
    %38 = arith.addf %15, %37 : vector<8x32xf32>
    %39 = vector.extract_strided_slice %9 {offsets = [0, 8], sizes = [8, 8], strides = [1, 1]} : vector<16x32xbf16> to vector<8x8xbf16>
    %40 = vector.extract_strided_slice %11 {offsets = [0, 8], sizes = [8, 8], strides = [1, 1]} : vector<16x32xbf16> to vector<8x8xbf16>
    %41 = vector.extract_strided_slice %13 {offsets = [0, 8], sizes = [8, 8], strides = [1, 1]} : vector<16x32xbf16> to vector<8x8xbf16>
    %cst_18 = arith.constant dense<0.000000e+00> : vector<8x8xf32>
    %42 = tpu.matmul %39, %40, %cst_18 {dimension_numbers = #tpu.dot_dimension_numbers<[1], [1], [0], [0], [0, 0, 1, 0], [], []>} : vector<8x8xbf16>, vector<8x8xbf16>, vector<8x8xf32> -> vector<8x8xf32>
    %c0_19 = arith.constant 0 : index
    %c1 = arith.constant 1 : index
    %c0_20 = arith.constant 0 : index
    %c0_21 = arith.constant 0 : index
    %43 = vector.load %arg2[%c0_19, %c1, %c0_20, %c0_21] : memref<2x4x8x8xbf16, #tpu.memory_space<vmem>>, vector<1x1x8x8xbf16>
    %44 = vector.shape_cast %43 : vector<1x1x8x8xbf16> to vector<8x8xbf16>
    %45 = arith.extf %44 : vector<8x8xbf16> to vector<8x8xf32>
    %46 = arith.addf %42, %45 : vector<8x8xf32>
    %cst_22 = arith.constant dense<0xFF800000> : vector<8xf32>
    %47 = vector.multi_reduction <maximumf>, %46, %cst_22 [1] : vector<8x8xf32> to vector<8xf32>
    %48 = vector.shape_cast %47 : vector<8xf32> to vector<8x1xf32>
    %49 = vector.broadcast %48 : vector<8x1xf32> to vector<8x8xf32>
    %50 = arith.subf %46, %49 : vector<8x8xf32>
    %51 = math.exp %50 : vector<8x8xf32>
    %cst_23 = arith.constant dense<0.000000e+00> : vector<8xf32>
    %52 = vector.multi_reduction <add>, %51, %cst_23 [1] : vector<8x8xf32> to vector<8xf32>
    %53 = vector.shape_cast %52 : vector<8xf32> to vector<8x1xf32>
    %54 = vector.broadcast %53 : vector<8x1xf32> to vector<8x8xf32>
    %55 = arith.divf %51, %54 : vector<8x8xf32>
    %56 = arith.truncf %55 : vector<8x8xf32> to vector<8x8xbf16>
    %cst_24 = arith.constant dense<0.000000e+00> : vector<8x8xf32>
    %57 = tpu.matmul %56, %41, %cst_24 {dimension_numbers = #tpu.dot_dimension_numbers<[1], [0], [0], [1], [0, 0, 1, 1], [], []>} : vector<8x8xbf16>, vector<8x8xbf16>, vector<8x8xf32> -> vector<8x8xf32>
    %58 = arith.truncf %57 : vector<8x8xf32> to vector<8x8xbf16>
    %59 = vector.extract_strided_slice %14 {offsets = [0, 8], sizes = [32, 8], strides = [1, 1]} : vector<32x32xbf16> to vector<32x8xbf16>
    %cst_25 = arith.constant dense<0.000000e+00> : vector<8x32xf32>
    %60 = tpu.matmul %58, %59, %cst_25 {dimension_numbers = #tpu.dot_dimension_numbers<[1], [1], [0], [0], [0, 0, 1, 0], [], []>} : vector<8x8xbf16>, vector<32x8xbf16>, vector<8x32xf32> -> vector<8x32xf32>
    %61 = arith.addf %38, %60 : vector<8x32xf32>
    %62 = vector.extract_strided_slice %9 {offsets = [0, 16], sizes = [8, 8], strides = [1, 1]} : vector<16x32xbf16> to vector<8x8xbf16>
    %63 = vector.extract_strided_slice %11 {offsets = [0, 16], sizes = [8, 8], strides = [1, 1]} : vector<16x32xbf16> to vector<8x8xbf16>
    %64 = vector.extract_strided_slice %13 {offsets = [0, 16], sizes = [8, 8], strides = [1, 1]} : vector<16x32xbf16> to vector<8x8xbf16>
    %cst_26 = arith.constant dense<0.000000e+00> : vector<8x8xf32>
    %65 = tpu.matmul %62, %63, %cst_26 {dimension_numbers = #tpu.dot_dimension_numbers<[1], [1], [0], [0], [0, 0, 1, 0], [], []>} : vector<8x8xbf16>, vector<8x8xbf16>, vector<8x8xf32> -> vector<8x8xf32>
    %c0_27 = arith.constant 0 : index
    %c2 = arith.constant 2 : index
    %c0_28 = arith.constant 0 : index
    %c0_29 = arith.constant 0 : index
    %66 = vector.load %arg2[%c0_27, %c2, %c0_28, %c0_29] : memref<2x4x8x8xbf16, #tpu.memory_space<vmem>>, vector<1x1x8x8xbf16>
    %67 = vector.shape_cast %66 : vector<1x1x8x8xbf16> to vector<8x8xbf16>
    %68 = arith.extf %67 : vector<8x8xbf16> to vector<8x8xf32>
    %69 = arith.addf %65, %68 : vector<8x8xf32>
    %cst_30 = arith.constant dense<0xFF800000> : vector<8xf32>
    %70 = vector.multi_reduction <maximumf>, %69, %cst_30 [1] : vector<8x8xf32> to vector<8xf32>
    %71 = vector.shape_cast %70 : vector<8xf32> to vector<8x1xf32>
    %72 = vector.broadcast %71 : vector<8x1xf32> to vector<8x8xf32>
    %73 = arith.subf %69, %72 : vector<8x8xf32>
    %74 = math.exp %73 : vector<8x8xf32>
    %cst_31 = arith.constant dense<0.000000e+00> : vector<8xf32>
    %75 = vector.multi_reduction <add>, %74, %cst_31 [1] : vector<8x8xf32> to vector<8xf32>
    %76 = vector.shape_cast %75 : vector<8xf32> to vector<8x1xf32>
    %77 = vector.broadcast %76 : vector<8x1xf32> to vector<8x8xf32>
    %78 = arith.divf %74, %77 : vector<8x8xf32>
    %79 = arith.truncf %78 : vector<8x8xf32> to vector<8x8xbf16>
    %cst_32 = arith.constant dense<0.000000e+00> : vector<8x8xf32>
    %80 = tpu.matmul %79, %64, %cst_32 {dimension_numbers = #tpu.dot_dimension_numbers<[1], [0], [0], [1], [0, 0, 1, 1], [], []>} : vector<8x8xbf16>, vector<8x8xbf16>, vector<8x8xf32> -> vector<8x8xf32>
    %81 = arith.truncf %80 : vector<8x8xf32> to vector<8x8xbf16>
    %82 = vector.extract_strided_slice %14 {offsets = [0, 16], sizes = [32, 8], strides = [1, 1]} : vector<32x32xbf16> to vector<32x8xbf16>
    %cst_33 = arith.constant dense<0.000000e+00> : vector<8x32xf32>
    %83 = tpu.matmul %81, %82, %cst_33 {dimension_numbers = #tpu.dot_dimension_numbers<[1], [1], [0], [0], [0, 0, 1, 0], [], []>} : vector<8x8xbf16>, vector<32x8xbf16>, vector<8x32xf32> -> vector<8x32xf32>
    %84 = arith.addf %61, %83 : vector<8x32xf32>
    %85 = vector.extract_strided_slice %9 {offsets = [0, 24], sizes = [8, 8], strides = [1, 1]} : vector<16x32xbf16> to vector<8x8xbf16>
    %86 = vector.extract_strided_slice %11 {offsets = [0, 24], sizes = [8, 8], strides = [1, 1]} : vector<16x32xbf16> to vector<8x8xbf16>
    %87 = vector.extract_strided_slice %13 {offsets = [0, 24], sizes = [8, 8], strides = [1, 1]} : vector<16x32xbf16> to vector<8x8xbf16>
    %cst_34 = arith.constant dense<0.000000e+00> : vector<8x8xf32>
    %88 = tpu.matmul %85, %86, %cst_34 {dimension_numbers = #tpu.dot_dimension_numbers<[1], [1], [0], [0], [0, 0, 1, 0], [], []>} : vector<8x8xbf16>, vector<8x8xbf16>, vector<8x8xf32> -> vector<8x8xf32>
    %c0_35 = arith.constant 0 : index
    %c3 = arith.constant 3 : index
    %c0_36 = arith.constant 0 : index
    %c0_37 = arith.constant 0 : index
    %89 = vector.load %arg2[%c0_35, %c3, %c0_36, %c0_37] : memref<2x4x8x8xbf16, #tpu.memory_space<vmem>>, vector<1x1x8x8xbf16>
    %90 = vector.shape_cast %89 : vector<1x1x8x8xbf16> to vector<8x8xbf16>
    %91 = arith.extf %90 : vector<8x8xbf16> to vector<8x8xf32>
    %92 = arith.addf %88, %91 : vector<8x8xf32>
    %cst_38 = arith.constant dense<0xFF800000> : vector<8xf32>
    %93 = vector.multi_reduction <maximumf>, %92, %cst_38 [1] : vector<8x8xf32> to vector<8xf32>
    %94 = vector.shape_cast %93 : vector<8xf32> to vector<8x1xf32>
    %95 = vector.broadcast %94 : vector<8x1xf32> to vector<8x8xf32>
    %96 = arith.subf %92, %95 : vector<8x8xf32>
    %97 = math.exp %96 : vector<8x8xf32>
    %cst_39 = arith.constant dense<0.000000e+00> : vector<8xf32>
    %98 = vector.multi_reduction <add>, %97, %cst_39 [1] : vector<8x8xf32> to vector<8xf32>
    %99 = vector.shape_cast %98 : vector<8xf32> to vector<8x1xf32>
    %100 = vector.broadcast %99 : vector<8x1xf32> to vector<8x8xf32>
    %101 = arith.divf %97, %100 : vector<8x8xf32>
    %102 = arith.truncf %101 : vector<8x8xf32> to vector<8x8xbf16>
    %cst_40 = arith.constant dense<0.000000e+00> : vector<8x8xf32>
    %103 = tpu.matmul %102, %87, %cst_40 {dimension_numbers = #tpu.dot_dimension_numbers<[1], [0], [0], [1], [0, 0, 1, 1], [], []>} : vector<8x8xbf16>, vector<8x8xbf16>, vector<8x8xf32> -> vector<8x8xf32>
    %104 = arith.truncf %103 : vector<8x8xf32> to vector<8x8xbf16>
    %105 = vector.extract_strided_slice %14 {offsets = [0, 24], sizes = [32, 8], strides = [1, 1]} : vector<32x32xbf16> to vector<32x8xbf16>
    %cst_41 = arith.constant dense<0.000000e+00> : vector<8x32xf32>
    %106 = tpu.matmul %104, %105, %cst_41 {dimension_numbers = #tpu.dot_dimension_numbers<[1], [1], [0], [0], [0, 0, 1, 0], [], []>} : vector<8x8xbf16>, vector<32x8xbf16>, vector<8x32xf32> -> vector<8x32xf32>
    %107 = arith.addf %84, %106 : vector<8x32xf32>
    %c0_42 = arith.constant 0 : index
    %c0_43 = arith.constant 0 : index
    %108 = vector.load %arg6[%c0_42, %c0_43] : memref<1x32xf32, #tpu.memory_space<vmem>>, vector<1x32xf32>
    %109 = vector.broadcast %108 : vector<1x32xf32> to vector<8x32xf32>
    %110 = arith.addf %107, %109 : vector<8x32xf32>
    %c0_44 = arith.constant 0 : index
    %c0_45 = arith.constant 0 : index
    %111 = vector.load %arg7[%c0_44, %c0_45] : memref<16x32xf32, #tpu.memory_space<vmem>>, vector<8x32xf32>
    tpu.vector_store %arg7[%c0_44, %c0_45], %110 {strides = array<i32>} : memref<16x32xf32, #tpu.memory_space<vmem>>, vector<8x32xf32>,
    %cst_46 = arith.constant 0.000000e+00 : f32
    %112 = vector.broadcast %cst_46 : f32 to vector<8x32xf32>
    %113 = vector.extract_strided_slice %9 {offsets = [8, 0], sizes = [8, 8], strides = [1, 1]} : vector<16x32xbf16> to vector<8x8xbf16>
    %114 = vector.extract_strided_slice %11 {offsets = [8, 0], sizes = [8, 8], strides = [1, 1]} : vector<16x32xbf16> to vector<8x8xbf16>
    %115 = vector.extract_strided_slice %13 {offsets = [8, 0], sizes = [8, 8], strides = [1, 1]} : vector<16x32xbf16> to vector<8x8xbf16>
    %cst_47 = arith.constant dense<0.000000e+00> : vector<8x8xf32>
    %116 = tpu.matmul %113, %114, %cst_47 {dimension_numbers = #tpu.dot_dimension_numbers<[1], [1], [0], [0], [0, 0, 1, 0], [], []>} : vector<8x8xbf16>, vector<8x8xbf16>, vector<8x8xf32> -> vector<8x8xf32>
    %c1_48 = arith.constant 1 : index
    %c0_49 = arith.constant 0 : index
    %c0_50 = arith.constant 0 : index
    %c0_51 = arith.constant 0 : index
    %117 = vector.load %arg2[%c1_48, %c0_49, %c0_50, %c0_51] : memref<2x4x8x8xbf16, #tpu.memory_space<vmem>>, vector<1x1x8x8xbf16>
    %118 = vector.shape_cast %117 : vector<1x1x8x8xbf16> to vector<8x8xbf16>
    %119 = arith.extf %118 : vector<8x8xbf16> to vector<8x8xf32>
    %120 = arith.addf %116, %119 : vector<8x8xf32>
    %cst_52 = arith.constant dense<0xFF800000> : vector<8xf32>
    %121 = vector.multi_reduction <maximumf>, %120, %cst_52 [1] : vector<8x8xf32> to vector<8xf32>
    %122 = vector.shape_cast %121 : vector<8xf32> to vector<8x1xf32>
    %123 = vector.broadcast %122 : vector<8x1xf32> to vector<8x8xf32>
    %124 = arith.subf %120, %123 : vector<8x8xf32>
    %125 = math.exp %124 : vector<8x8xf32>
    %cst_53 = arith.constant dense<0.000000e+00> : vector<8xf32>
    %126 = vector.multi_reduction <add>, %125, %cst_53 [1] : vector<8x8xf32> to vector<8xf32>
    %127 = vector.shape_cast %126 : vector<8xf32> to vector<8x1xf32>
    %128 = vector.broadcast %127 : vector<8x1xf32> to vector<8x8xf32>
    %129 = arith.divf %125, %128 : vector<8x8xf32>
    %130 = arith.truncf %129 : vector<8x8xf32> to vector<8x8xbf16>
    %cst_54 = arith.constant dense<0.000000e+00> : vector<8x8xf32>
    %131 = tpu.matmul %130, %115, %cst_54 {dimension_numbers = #tpu.dot_dimension_numbers<[1], [0], [0], [1], [0, 0, 1, 1], [], []>} : vector<8x8xbf16>, vector<8x8xbf16>, vector<8x8xf32> -> vector<8x8xf32>
    %132 = arith.truncf %131 : vector<8x8xf32> to vector<8x8xbf16>
    %133 = vector.extract_strided_slice %14 {offsets = [0, 0], sizes = [32, 8], strides = [1, 1]} : vector<32x32xbf16> to vector<32x8xbf16>
    %cst_55 = arith.constant dense<0.000000e+00> : vector<8x32xf32>
    %134 = tpu.matmul %132, %133, %cst_55 {dimension_numbers = #tpu.dot_dimension_numbers<[1], [1], [0], [0], [0, 0, 1, 0], [], []>} : vector<8x8xbf16>, vector<32x8xbf16>, vector<8x32xf32> -> vector<8x32xf32>
    %135 = arith.addf %112, %134 : vector<8x32xf32>
    %136 = vector.extract_strided_slice %9 {offsets = [8, 8], sizes = [8, 8], strides = [1, 1]} : vector<16x32xbf16> to vector<8x8xbf16>
    %137 = vector.extract_strided_slice %11 {offsets = [8, 8], sizes = [8, 8], strides = [1, 1]} : vector<16x32xbf16> to vector<8x8xbf16>
    %138 = vector.extract_strided_slice %13 {offsets = [8, 8], sizes = [8, 8], strides = [1, 1]} : vector<16x32xbf16> to vector<8x8xbf16>
    %cst_56 = arith.constant dense<0.000000e+00> : vector<8x8xf32>
    %139 = tpu.matmul %136, %137, %cst_56 {dimension_numbers = #tpu.dot_dimension_numbers<[1], [1], [0], [0], [0, 0, 1, 0], [], []>} : vector<8x8xbf16>, vector<8x8xbf16>, vector<8x8xf32> -> vector<8x8xf32>
    %c1_57 = arith.constant 1 : index
    %c1_58 = arith.constant 1 : index
    %c0_59 = arith.constant 0 : index
    %c0_60 = arith.constant 0 : index
    %140 = vector.load %arg2[%c1_57, %c1_58, %c0_59, %c0_60] : memref<2x4x8x8xbf16, #tpu.memory_space<vmem>>, vector<1x1x8x8xbf16>
    %141 = vector.shape_cast %140 : vector<1x1x8x8xbf16> to vector<8x8xbf16>
    %142 = arith.extf %141 : vector<8x8xbf16> to vector<8x8xf32>
    %143 = arith.addf %139, %142 : vector<8x8xf32>
    %cst_61 = arith.constant dense<0xFF800000> : vector<8xf32>
    %144 = vector.multi_reduction <maximumf>, %143, %cst_61 [1] : vector<8x8xf32> to vector<8xf32>
    %145 = vector.shape_cast %144 : vector<8xf32> to vector<8x1xf32>
    %146 = vector.broadcast %145 : vector<8x1xf32> to vector<8x8xf32>
    %147 = arith.subf %143, %146 : vector<8x8xf32>
    %148 = math.exp %147 : vector<8x8xf32>
    %cst_62 = arith.constant dense<0.000000e+00> : vector<8xf32>
    %149 = vector.multi_reduction <add>, %148, %cst_62 [1] : vector<8x8xf32> to vector<8xf32>
    %150 = vector.shape_cast %149 : vector<8xf32> to vector<8x1xf32>
    %151 = vector.broadcast %150 : vector<8x1xf32> to vector<8x8xf32>
    %152 = arith.divf %148, %151 : vector<8x8xf32>
    %153 = arith.truncf %152 : vector<8x8xf32> to vector<8x8xbf16>
    %cst_63 = arith.constant dense<0.000000e+00> : vector<8x8xf32>
    %154 = tpu.matmul %153, %138, %cst_63 {dimension_numbers = #tpu.dot_dimension_numbers<[1], [0], [0], [1], [0, 0, 1, 1], [], []>} : vector<8x8xbf16>, vector<8x8xbf16>, vector<8x8xf32> -> vector<8x8xf32>
    %155 = arith.truncf %154 : vector<8x8xf32> to vector<8x8xbf16>
    %156 = vector.extract_strided_slice %14 {offsets = [0, 8], sizes = [32, 8], strides = [1, 1]} : vector<32x32xbf16> to vector<32x8xbf16>
    %cst_64 = arith.constant dense<0.000000e+00> : vector<8x32xf32>
    %157 = tpu.matmul %155, %156, %cst_64 {dimension_numbers = #tpu.dot_dimension_numbers<[1], [1], [0], [0], [0, 0, 1, 0], [], []>} : vector<8x8xbf16>, vector<32x8xbf16>, vector<8x32xf32> -> vector<8x32xf32>
    %158 = arith.addf %135, %157 : vector<8x32xf32>
    %159 = vector.extract_strided_slice %9 {offsets = [8, 16], sizes = [8, 8], strides = [1, 1]} : vector<16x32xbf16> to vector<8x8xbf16>
    %160 = vector.extract_strided_slice %11 {offsets = [8, 16], sizes = [8, 8], strides = [1, 1]} : vector<16x32xbf16> to vector<8x8xbf16>
    %161 = vector.extract_strided_slice %13 {offsets = [8, 16], sizes = [8, 8], strides = [1, 1]} : vector<16x32xbf16> to vector<8x8xbf16>
    %cst_65 = arith.constant dense<0.000000e+00> : vector<8x8xf32>
    %162 = tpu.matmul %159, %160, %cst_65 {dimension_numbers = #tpu.dot_dimension_numbers<[1], [1], [0], [0], [0, 0, 1, 0], [], []>} : vector<8x8xbf16>, vector<8x8xbf16>, vector<8x8xf32> -> vector<8x8xf32>
    %c1_66 = arith.constant 1 : index
    %c2_67 = arith.constant 2 : index
    %c0_68 = arith.constant 0 : index
    %c0_69 = arith.constant 0 : index
    %163 = vector.load %arg2[%c1_66, %c2_67, %c0_68, %c0_69] : memref<2x4x8x8xbf16, #tpu.memory_space<vmem>>, vector<1x1x8x8xbf16>
    %164 = vector.shape_cast %163 : vector<1x1x8x8xbf16> to vector<8x8xbf16>
    %165 = arith.extf %164 : vector<8x8xbf16> to vector<8x8xf32>
    %166 = arith.addf %162, %165 : vector<8x8xf32>
    %cst_70 = arith.constant dense<0xFF800000> : vector<8xf32>
    %167 = vector.multi_reduction <maximumf>, %166, %cst_70 [1] : vector<8x8xf32> to vector<8xf32>
    %168 = vector.shape_cast %167 : vector<8xf32> to vector<8x1xf32>
    %169 = vector.broadcast %168 : vector<8x1xf32> to vector<8x8xf32>
    %170 = arith.subf %166, %169 : vector<8x8xf32>
    %171 = math.exp %170 : vector<8x8xf32>
    %cst_71 = arith.constant dense<0.000000e+00> : vector<8xf32>
    %172 = vector.multi_reduction <add>, %171, %cst_71 [1] : vector<8x8xf32> to vector<8xf32>
    %173 = vector.shape_cast %172 : vector<8xf32> to vector<8x1xf32>
    %174 = vector.broadcast %173 : vector<8x1xf32> to vector<8x8xf32>
    %175 = arith.divf %171, %174 : vector<8x8xf32>
    %176 = arith.truncf %175 : vector<8x8xf32> to vector<8x8xbf16>
    %cst_72 = arith.constant dense<0.000000e+00> : vector<8x8xf32>
    %177 = tpu.matmul %176, %161, %cst_72 {dimension_numbers = #tpu.dot_dimension_numbers<[1], [0], [0], [1], [0, 0, 1, 1], [], []>} : vector<8x8xbf16>, vector<8x8xbf16>, vector<8x8xf32> -> vector<8x8xf32>
    %178 = arith.truncf %177 : vector<8x8xf32> to vector<8x8xbf16>
    %179 = vector.extract_strided_slice %14 {offsets = [0, 16], sizes = [32, 8], strides = [1, 1]} : vector<32x32xbf16> to vector<32x8xbf16>
    %cst_73 = arith.constant dense<0.000000e+00> : vector<8x32xf32>
    %180 = tpu.matmul %178, %179, %cst_73 {dimension_numbers = #tpu.dot_dimension_numbers<[1], [1], [0], [0], [0, 0, 1, 0], [], []>} : vector<8x8xbf16>, vector<32x8xbf16>, vector<8x32xf32> -> vector<8x32xf32>
    %181 = arith.addf %158, %180 : vector<8x32xf32>
    %182 = vector.extract_strided_slice %9 {offsets = [8, 24], sizes = [8, 8], strides = [1, 1]} : vector<16x32xbf16> to vector<8x8xbf16>
    %183 = vector.extract_strided_slice %11 {offsets = [8, 24], sizes = [8, 8], strides = [1, 1]} : vector<16x32xbf16> to vector<8x8xbf16>
    %184 = vector.extract_strided_slice %13 {offsets = [8, 24], sizes = [8, 8], strides = [1, 1]} : vector<16x32xbf16> to vector<8x8xbf16>
    %cst_74 = arith.constant dense<0.000000e+00> : vector<8x8xf32>
    %185 = tpu.matmul %182, %183, %cst_74 {dimension_numbers = #tpu.dot_dimension_numbers<[1], [1], [0], [0], [0, 0, 1, 0], [], []>} : vector<8x8xbf16>, vector<8x8xbf16>, vector<8x8xf32> -> vector<8x8xf32>
    %c1_75 = arith.constant 1 : index
    %c3_76 = arith.constant 3 : index
    %c0_77 = arith.constant 0 : index
    %c0_78 = arith.constant 0 : index
    %186 = vector.load %arg2[%c1_75, %c3_76, %c0_77, %c0_78] : memref<2x4x8x8xbf16, #tpu.memory_space<vmem>>, vector<1x1x8x8xbf16>
    %187 = vector.shape_cast %186 : vector<1x1x8x8xbf16> to vector<8x8xbf16>
    %188 = arith.extf %187 : vector<8x8xbf16> to vector<8x8xf32>
    %189 = arith.addf %185, %188 : vector<8x8xf32>
    %cst_79 = arith.constant dense<0xFF800000> : vector<8xf32>
    %190 = vector.multi_reduction <maximumf>, %189, %cst_79 [1] : vector<8x8xf32> to vector<8xf32>
    %191 = vector.shape_cast %190 : vector<8xf32> to vector<8x1xf32>
    %192 = vector.broadcast %191 : vector<8x1xf32> to vector<8x8xf32>
    %193 = arith.subf %189, %192 : vector<8x8xf32>
    %194 = math.exp %193 : vector<8x8xf32>
    %cst_80 = arith.constant dense<0.000000e+00> : vector<8xf32>
    %195 = vector.multi_reduction <add>, %194, %cst_80 [1] : vector<8x8xf32> to vector<8xf32>
    %196 = vector.shape_cast %195 : vector<8xf32> to vector<8x1xf32>
    %197 = vector.broadcast %196 : vector<8x1xf32> to vector<8x8xf32>
    %198 = arith.divf %194, %197 : vector<8x8xf32>
    %199 = arith.truncf %198 : vector<8x8xf32> to vector<8x8xbf16>
    %cst_81 = arith.constant dense<0.000000e+00> : vector<8x8xf32>
    %200 = tpu.matmul %199, %184, %cst_81 {dimension_numbers = #tpu.dot_dimension_numbers<[1], [0], [0], [1], [0, 0, 1, 1], [], []>} : vector<8x8xbf16>, vector<8x8xbf16>, vector<8x8xf32> -> vector<8x8xf32>
    %201 = arith.truncf %200 : vector<8x8xf32> to vector<8x8xbf16>
    %202 = vector.extract_strided_slice %14 {offsets = [0, 24], sizes = [32, 8], strides = [1, 1]} : vector<32x32xbf16> to vector<32x8xbf16>
    %cst_82 = arith.constant dense<0.000000e+00> : vector<8x32xf32>
    %203 = tpu.matmul %201, %202, %cst_82 {dimension_numbers = #tpu.dot_dimension_numbers<[1], [1], [0], [0], [0, 0, 1, 0], [], []>} : vector<8x8xbf16>, vector<32x8xbf16>, vector<8x32xf32> -> vector<8x32xf32>
    %204 = arith.addf %181, %203 : vector<8x32xf32>
    %c0_83 = arith.constant 0 : index
    %c0_84 = arith.constant 0 : index
    %205 = vector.load %arg6[%c0_83, %c0_84] : memref<1x32xf32, #tpu.memory_space<vmem>>, vector<1x32xf32>
    %206 = vector.broadcast %205 : vector<1x32xf32> to vector<8x32xf32>
    %207 = arith.addf %204, %206 : vector<8x32xf32>
    %c8 = arith.constant 8 : index
    %c0_85 = arith.constant 0 : index
    %208 = vector.load %arg7[%c8, %c0_85] : memref<16x32xf32, #tpu.memory_space<vmem>>, vector<8x32xf32>
    tpu.vector_store %arg7[%c8, %c0_85], %207 {strides = array<i32>} : memref<16x32xf32, #tpu.memory_space<vmem>>, vector<8x32xf32>,
    return
  }
  func.func @transform_0(%arg0: i32) -> (i32, i32) {
    %c0_i32 = arith.constant 0 : i32
    %c0_i32_0 = arith.constant 0 : i32
    %c0_i32_1 = arith.constant 0 : i32
    return %c0_i32, %c0_i32_0 : i32, i32
  }
  func.func @transform_1(%arg0: i32) -> (i32, i32, i32, i32) {
    %c0_i32 = arith.constant 0 : i32
    %c0_i32_0 = arith.constant 0 : i32
    %c0_i32_1 = arith.constant 0 : i32
    %c0_i32_2 = arith.constant 0 : i32
    %c0_i32_3 = arith.constant 0 : i32
    return %c0_i32, %c0_i32_0, %c0_i32_1, %c0_i32_2 : i32, i32, i32, i32
  }
  func.func @transform_2(%arg0: i32) -> (i32, i32) {
    %c0_i32 = arith.constant 0 : i32
    %c0_i32_0 = arith.constant 0 : i32
    %c0_i32_1 = arith.constant 0 : i32
    return %c0_i32, %c0_i32_0 : i32, i32
  }
  func.func @transform_3(%arg0: i32) -> (i32, i32) {
    %c0_i32 = arith.constant 0 : i32
    %c0_i32_0 = arith.constant 0 : i32
    %c0_i32_1 = arith.constant 0 : i32
    return %c0_i32, %c0_i32_0 : i32, i32
  }
  func.func @transform_4(%arg0: i32) -> (i32, i32) {
    %c0_i32 = arith.constant 0 : i32
    %c0_i32_0 = arith.constant 0 : i32
    %c0_i32_1 = arith.constant 0 : i32
    return %c0_i32, %c0_i32_0 : i32, i32
  }
  func.func @transform_5(%arg0: i32) -> (i32, i32) {
    %c0_i32 = arith.constant 0 : i32
    %c0_i32_0 = arith.constant 0 : i32
    %c0_i32_1 = arith.constant 0 : i32
    return %c0_i32, %c0_i32_0 : i32, i32
  }
  func.func @transform_6(%arg0: i32) -> (i32, i32) {
    %c0_i32 = arith.constant 0 : i32
    %c0_i32_0 = arith.constant 0 : i32
    %c0_i32_1 = arith.constant 0 : i32
    return %c0_i32, %c0_i32_0 : i32, i32
  }
}

</mosaic_0001>

<llo_original>
// kernel: tpu_custom_call.1
$region0: #{tpu_custom_call.1}
  #allocation0 [shape = 'u32[]', space=smem, size = 0x4, offset = 0x4, fixed_abs, tag = 'smem constant byte address 0x4 - core index']
  #allocation1 [shape = 'u32[72,128]{1,0:T(1,128)}', space=vmem, size = 0x9000, scoped, tag = 'internal scratch']
  %s0 = inlined_call_operand.hbm [shape: bf16[16,96], index: 0, kind: input, shape index: {}]
  %s1 = inlined_call_operand.hbm [shape: bf16[2,4,8,8], index: 1, kind: input, shape index: {}]
  %s2 = inlined_call_operand.hbm [shape: bf16[96,96], index: 2, kind: input, shape index: {}]
  %s3 = inlined_call_operand.vmem [shape: f32[1,96], index: 3, kind: input, shape index: {}]
  %s4 = inlined_call_operand.hbm [shape: bf16[32,32], index: 4, kind: input, shape index: {}]
  %s5 = inlined_call_operand.vmem [shape: f32[1,32], index: 5, kind: input, shape index: {}]
  %s6 = inlined_call_operand.hbm [shape: f32[16,32], index: 6, kind: output, shape index: {}]
  %s7 = sld [smem:[#allocation0]]
  $region50: #{tpu_custom_call.1} parent=0
    _
  %s9 = ssub.s32 1, %s7
  %s10 = scalar_select 0, %s9, %s7
  $region1: #{tpu_custom_call.1} parent=0
    #allocation2 [shape = 'u8[4096]{0}', space=vmem, size = 0x1000, scoped, tag = 'input window, operand 0, single buffered']
    #allocation3 [shape = 's32[1]{0}', space=sflag, size = 0x4, scoped, tag = 'scoped memory for tpu_custom_call.1']
    #allocation4 [shape = 's32[1]{0}', space=sflag, size = 0x4, scoped, tag = 'scoped memory for tpu_custom_call.1']
    #allocation5 [shape = 'u8[16384]{0}', space=vmem, size = 0x4000, scoped, tag = 'input window, operand 1, single buffered']
    #allocation6 [shape = 's32[1]{0}', space=sflag, size = 0x4, scoped, tag = 'scoped memory for tpu_custom_call.1']
    #allocation7 [shape = 'u8[24576]{0}', space=vmem, size = 0x6000, scoped, tag = 'input window, operand 2, single buffered']
    #allocation8 [shape = 'u8[8192]{0}', space=vmem, size = 0x2000, scoped, tag = 'input window, operand 4, single buffered']
    #allocation9 [shape = 's32[1]{0}', space=sflag, size = 0x4, scoped, tag = 'scoped memory for tpu_custom_call.1']
    #allocation10 [shape = 'u8[8192]{0}', space=vmem, size = 0x2000, scoped, tag = 'output window, operand 0, single buffered']
    %11 = vsyncpa [#allocation3], 0
    %12 = vsyncpa [#allocation6], 0
    %13 = vsyncpa [#allocation9], 0
    %14 = vsyncpa [#allocation4], 0
    // Predicated region
    $region2: #{tpu_custom_call.1} parent=1 // pred_check
      _
    $region3: #{tpu_custom_call.1} parent=1 // pred_check_branch
      %16 = sbr.rel (0) target = $region5
    $region4: #{tpu_custom_call.1} parent=1 // pred_region
      %18 = vsyncadd [#allocation3], 0
      %s19 = sshll.u32 %s0, 4
      %s20 = int_to_ptr.hbm [resolvable:$true] %s19
      %s21 = sshll.u32 [#allocation2], 4
      %s22 = int_to_ptr.vmem [resolvable:$true] %s21
      %27 = dma.hbm_to_vmem [thread:$0]  %s20, 128, %s22, [#allocation3], 64, 64, 4
    $region5: #{tpu_custom_call.1} parent=1 // pred_fallthru
      _
    // Predicated region
    $region6: #{tpu_custom_call.1} parent=1 // pred_check
      _
    $region7: #{tpu_custom_call.1} parent=1 // pred_check_branch
      %29 = sbr.rel (0) target = $region9
    $region8: #{tpu_custom_call.1} parent=1 // pred_region
      %31 = vsyncadd [#allocation6], 0
      %s32 = sshll.u32 %s1, 4
      %s33 = int_to_ptr.hbm [resolvable:$true] %s32
      %s34 = sshll.u32 [#allocation5], 4
      %s35 = int_to_ptr.vmem [resolvable:$true] %s34
      %40 = dma.hbm_to_vmem [thread:$0]  %s33, 512, %s35, [#allocation6], 64, 64, 4
    $region9: #{tpu_custom_call.1} parent=1 // pred_fallthru
      _
    // Predicated region
    $region10: #{tpu_custom_call.1} parent=1 // pred_check
      _
    $region11: #{tpu_custom_call.1} parent=1 // pred_check_branch
      %42 = sbr.rel (0) target = $region13
    $region12: #{tpu_custom_call.1} parent=1 // pred_region
      %44 = vsyncadd [#allocation6], 0
      %s45 = sshll.u32 %s2, 4
      %s46 = int_to_ptr.hbm [resolvable:$true] %s45
      %s47 = sshll.u32 [#allocation7], 4
      %s48 = int_to_ptr.vmem [resolvable:$true] %s47
      %53 = dma.hbm_to_vmem [thread:$0]  %s46, 768, %s48, [#allocation6], 64, 64, 4
    $region13: #{tpu_custom_call.1} parent=1 // pred_fallthru
      _
    // Predicated region
    $region14: #{tpu_custom_call.1} parent=1 // pred_check
      _
    $region15: #{tpu_custom_call.1} parent=1 // pred_check_branch
      %55 = sbr.rel (0) target = $region17
    $region16: #{tpu_custom_call.1} parent=1 // pred_region
      _
    $region17: #{tpu_custom_call.1} parent=1 // pred_fallthru
      _
    // Predicated region
    $region18: #{tpu_custom_call.1} parent=1 // pred_check
      _
    $region19: #{tpu_custom_call.1} parent=1 // pred_check_branch
      %57 = sbr.rel (0) target = $region21
    $region20: #{tpu_custom_call.1} parent=1 // pred_region
      %59 = vsyncadd [#allocation9], 0
      %s60 = sshll.u32 %s4, 4
      %s61 = int_to_ptr.hbm [resolvable:$true] %s60
      %s62 = sshll.u32 [#allocation8], 4
      %s63 = int_to_ptr.vmem [resolvable:$true] %s62
      %68 = dma.hbm_to_vmem [thread:$0]  %s61, 256, %s63, [#allocation9], 64, 64, 4
    $region21: #{tpu_custom_call.1} parent=1 // pred_fallthru
      _
    // Predicated region
    $region22: #{tpu_custom_call.1} parent=1 // pred_check
      _
    $region23: #{tpu_custom_call.1} parent=1 // pred_check_branch
      %70 = sbr.rel (0) target = $region25
    $region24: #{tpu_custom_call.1} parent=1 // pred_region
      _
    $region25: #{tpu_custom_call.1} parent=1 // pred_fallthru
      _
    // Predicated region
    $region26: #{tpu_custom_call.1} parent=1 // pred_check
      _
    $region27: #{tpu_custom_call.1} parent=1 // pred_check_branch
      %72 = sbr.rel (0) target = $region29
    $region28: #{tpu_custom_call.1} parent=1 // pred_region
      %74 = dma.done [#allocation3], 128
    $region29: #{tpu_custom_call.1} parent=1 // pred_fallthru
      _
    // Predicated region
    $region30: #{tpu_custom_call.1} parent=1 // pred_check
      _
    $region31: #{tpu_custom_call.1} parent=1 // pred_check_branch
      %76 = sbr.rel (0) target = $region33
    $region32: #{tpu_custom_call.1} parent=1 // pred_region
      %78 = dma.done [#allocation6], 512
    $region33: #{tpu_custom_call.1} parent=1 // pred_fallthru
      _
    // Predicated region
    $region34: #{tpu_custom_call.1} parent=1 // pred_check
      _
    $region35: #{tpu_custom_call.1} parent=1 // pred_check_branch
      %80 = sbr.rel (0) target = $region37
    $region36: #{tpu_custom_call.1} parent=1 // pred_region
      %82 = dma.done [#allocation6], 768
    $region37: #{tpu_custom_call.1} parent=1 // pred_fallthru
      _
    // Predicated region
    $region38: #{tpu_custom_call.1} parent=1 // pred_check
      _
    $region39: #{tpu_custom_call.1} parent=1 // pred_check_branch
      %84 = sbr.rel (0) target = $region41
    $region40: #{tpu_custom_call.1} parent=1 // pred_region
      %86 = dma.done [#allocation9], 256
    $region41: #{tpu_custom_call.1} parent=1 // pred_fallthru
      _
    %v88 = vld [vmem:[#allocation2] sm:$0xf]
    %v89 = vld [vmem:[#allocation2 + $0x4] sm:$0xf]
    %v90 = vld [vmem:[#allocation7] sm:$0xf]
    %v91 = vld [vmem:[#allocation7 + $0x4] sm:$0xf]
    %v92 = vld [vmem:[#allocation7 + $0x8] sm:$0xf]
    %v93 = vld [vmem:[#allocation7 + $0xc] sm:$0xf]
    %v94 = vld [vmem:[#allocation7 + $0x10] sm:$0xf]
    %v95 = vld [vmem:[#allocation7 + $0x14] sm:$0xf]
    %v96 = vld [vmem:[#allocation7 + $0x18] sm:$0xf]
    %v97 = vld [vmem:[#allocation7 + $0x1c] sm:$0xf]
    %v98 = vld [vmem:[#allocation7 + $0x20] sm:$0xf]
    %v99 = vld [vmem:[#allocation7 + $0x24] sm:$0xf]
    %v100 = vld [vmem:[#allocation7 + $0x28] sm:$0xf]
    %v101 = vld [vmem:[#allocation7 + $0x2c] sm:$0xf]
    %v102 = vld [vmem:[%s3] sm:$0x1]
    %v104 = vperm.slane %v102, 0
    %v108 = vunpack.c.l.b16 %v88
    %v109 = vunpack.c.l.b16 %v89
    %v110 = vpack.c.b16 %v109, %v108
    %v123 = vunpack.c.l.b16 %v90
    %v124 = vunpack.c.l.b16 %v91
    %v125 = vunpack.c.l.b16 %v92
    %v126 = vunpack.c.l.b16 %v93
    %v127 = vunpack.c.l.b16 %v94
    %v128 = vunpack.c.l.b16 %v95
    %v129 = vunpack.c.l.b16 %v96
    %v130 = vunpack.c.l.b16 %v97
    %v131 = vunpack.c.l.b16 %v98
    %v132 = vunpack.c.l.b16 %v99
    %v133 = vunpack.c.l.b16 %v100
    %v134 = vunpack.c.l.b16 %v101
    %v135 = vpack.c.b16 %v124, %v123
    %v136 = vpack.c.b16 %v126, %v125
    %v137 = vpack.c.b16 %v128, %v127
    %v138 = vpack.c.b16 %v130, %v129
    %v139 = vpack.c.b16 %v132, %v131
    %v140 = vpack.c.b16 %v134, %v133
    %vm141 = vcmask 785408
    %v143 = vsel %vm141, %v110, 0
    %v146 = vsel %vm141, %v135, 0
    %v149 = vsel %vm141, %v136, 0
    %v152 = vsel %vm141, %v137, 0
    %v155 = vsel %vm141, %v138, 0
    %v158 = vsel %vm141, %v139, 0
    %v161 = vsel %vm141, %v140, 0
    %163 = vmatpush.bf16.xpose.msra.mxu0 0
    %164 = vmatpush.bf16.xpose.msra.mxu0 0
    %165 = vmatpush.bf16.xpose.msra.mxu0 %v161
    %166 = vmatpush.bf16.xpose.msra.mxu0 %v158
    %167 = vmatpush.bf16.xpose.msra.mxu0 %v155
    %168 = vmatpush.bf16.xpose.msra.mxu0 %v152
    %169 = vmatpush.bf16.xpose.msra.mxu0 %v149
    %170 = vmatpush.bf16.xpose.msra.mxu0 %v146
    %171 = vmatmul.bf16.gmra.mxu0 %v143
    %v172 = vpop.f32.mrf.mxu0
    %v173 = vadd.f32 %v104, %v172
    %v174 = vpop.f32.mrf.mxu0
    %v175 = vadd.f32 %v104, %v174
    %176 = vdwg.mxu0
    %v177 = vmul.f32 %v173, 0.35355338
    %v178 = vmul.f32 %v175, 0.35355338
    %v179 = vpack.c.bf16 %v177, %v177
    %v180 = vpack.c.bf16 %v178, %v178
    %v181 = vpack.c.bf16 %v173, %v173
    %v182 = vpack.c.bf16 %v175, %v175
    %v183 = vld [vmem:[#allocation8] sm:$0xf]
    %v184 = vld [vmem:[#allocation8 + $0x4] sm:$0xf]
    %v185 = vld [vmem:[#allocation8 + $0x8] sm:$0xf]
    %v186 = vld [vmem:[#allocation8 + $0xc] sm:$0xf]
    %v187 = vld [vmem:[#allocation5] sm:$0xf]
    %v188 = vunpack.c.l.bf16 %v187
    %v190 = vunpack.c.l.b16 %v181
    %v191 = vpack.c.b16 %v190, %v190
    %192 = vrot.lane.b32.xlu0 %v191, 96
    %v193 = vpop.permute.xlu0 %192
    %vm194 = vcmask 64512
    %v196 = vsel %vm194, %v179, 0
    %v199 = vsel %vm194, %v193, 0
    %201 = vmatpush.bf16.xpose.msra.mxu0 0
    %202 = vmatpush.bf16.xpose.msra.mxu0 0
    %203 = vmatpush.bf16.xpose.msra.mxu0 0
    %204 = vmatpush.bf16.xpose.msra.mxu0 0
    %205 = vmatpush.bf16.xpose.msra.mxu0 0
    %206 = vmatpush.bf16.xpose.msra.mxu0 0
    %207 = vmatpush.bf16.xpose.msra.mxu0 0
    %208 = vmatpush.bf16.xpose.msra.mxu0 %v199
    %209 = vmatmul.bf16.gmra.mxu0 %v196
    %v210 = vpop.f32.mrf.mxu0
    %v211 = vadd.f32 %v188, %v210
    %v212 = vpop.f32.mrf.mxu0
    %213 = vdwg.mxu0
    %v214 = vsel %vm194, %v211, -inf
    %215 = vmax.xlane.f32.xlu0 %v214
    %v216 = vpop.xlane.xlu0 %215
    %v217 = vsub.f32 %v211, %v216
    %v218 = vmul.f32 %v217, 1.442695
    %v219 = vpow.pop %v218
    %v220 = vsel %vm194, %v219, 0.0
    %221 = vadd.xlane.f32.xlu0 %v220
    %v222 = vpop.xlane.xlu0 %221
    %v223 = vrcp.pop %v222
    %v224 = vmul.f32 %v222, %v223
    %v225 = vsub.f32 1.0, %v224
    %v226 = vmul.f32 %v223, %v225
    %v227 = vadd.f32 %v223, %v226
    %vm228 = vweird.f32 %v222
    %vm229 = vweird.f32 %v223
    %vm230 = vmor %vm228, %vm229
    %v231 = vsel %vm230, %v223, %v227
    %v232 = vand.u32 2147483647, %v222
    %vm233 = vcmp.eq.f32.partialorder %v232, 8.507059e+37
    %v234 = vand.u32 %v222, 2147483648
    %v235 = vor.u32 1.1754944e-38, %v234
    %v236 = vsel %vm233, %v235, %v231
    %v237 = vmul.f32 %v219, %v236
    %v238 = vpack.c.bf16 %v237, %v237
    %239 = vrot.lane.b32.xlu0 %v191, 64
    %v240 = vpop.permute.xlu0 %239
    %v242 = vsel %vm194, %v238, 0
    %vm244 = vcmask 1043456
    %v246 = vsel %vm244, %v240, 0
    %248 = vmatpush.bf16.msra.mxu0 0
    %249 = vmatpush.bf16.msra.mxu0 0
    %250 = vmatpush.bf16.msra.mxu0 0
    %251 = vmatpush.bf16.msra.mxu0 0
    %252 = vmatpush.bf16.msra.mxu0 0
    %253 = vmatpush.bf16.msra.mxu0 0
    %254 = vmatpush.bf16.msra.mxu0 0
    %255 = vmatpush.bf16.msra.mxu0 %v246
    %256 = vmatmul.bf16.gmra.mxu0 %v242
    %v257 = vpop.f32.mrf.mxu0
    %v258 = vadd.f32 0.0, %v257
    %v259 = vpop.f32.mrf.mxu0
    %260 = vdwg.mxu0
    %v261 = vpack.c.bf16 %v258, %v258
    %s262 = scalar_lea.vmem [#allocation5], 4
    %v263 = vld [vmem:[%s262] sm:$0xf]
    %v264 = vunpack.c.l.bf16 %v263
    %v266 = vunpack.c.l.b16 %v179
    %v267 = vpack.c.b16 %v266, %v266
    %268 = vrot.lane.b32.xlu0 %v267, 120
    %v269 = vpop.permute.xlu0 %268
    %270 = vrot.lane.b32.xlu0 %v191, 88
    %v271 = vpop.permute.xlu0 %270
    %v273 = vsel %vm194, %v269, 0
    %v276 = vsel %vm194, %v271, 0
    %278 = vmatpush.bf16.xpose.msra.mxu0 0
    %279 = vmatpush.bf16.xpose.msra.mxu0 0
    %280 = vmatpush.bf16.xpose.msra.mxu0 0
    %281 = vmatpush.bf16.xpose.msra.mxu0 0
    %282 = vmatpush.bf16.xpose.msra.mxu0 0
    %283 = vmatpush.bf16.xpose.msra.mxu0 0
    %284 = vmatpush.bf16.xpose.msra.mxu0 0
    %285 = vmatpush.bf16.xpose.msra.mxu0 %v276
    %286 = vmatmul.bf16.gmra.mxu0 %v273
    %v287 = vpop.f32.mrf.mxu0
    %v288 = vadd.f32 %v264, %v287
    %v289 = vpop.f32.mrf.mxu0
    %290 = vdwg.mxu0
    %v291 = vsel %vm194, %v288, -inf
    %292 = vmax.xlane.f32.xlu0 %v291
    %v293 = vpop.xlane.xlu0 %292
    %v294 = vsub.f32 %v288, %v293
    %v295 = vmul.f32 %v294, 1.442695
    %v296 = vpow.pop %v295
    %v297 = vsel %vm194, %v296, 0.0
    %298 = vadd.xlane.f32.xlu0 %v297
    %v299 = vpop.xlane.xlu0 %298
    %v300 = vrcp.pop %v299
    %v301 = vmul.f32 %v299, %v300
    %v302 = vsub.f32 1.0, %v301
    %v303 = vmul.f32 %v300, %v302
    %v304 = vadd.f32 %v300, %v303
    %vm305 = vweird.f32 %v299
    %vm306 = vweird.f32 %v300
    %vm307 = vmor %vm305, %vm306
    %v308 = vsel %vm307, %v300, %v304
    %v309 = vand.u32 2147483647, %v299
    %vm310 = vcmp.eq.f32.partialorder %v309, 8.507059e+37
    %v311 = vand.u32 %v299, 2147483648
    %v312 = vor.u32 1.1754944e-38, %v311
    %v313 = vsel %vm310, %v312, %v308
    %v314 = vmul.f32 %v296, %v313
    %v315 = vpack.c.bf16 %v314, %v314
    %316 = vrot.lane.b32.xlu0 %v191, 56
    %v317 = vpop.permute.xlu0 %316
    %v319 = vsel %vm194, %v315, 0
    %v322 = vsel %vm244, %v317, 0
    %324 = vmatpush.bf16.msra.mxu0 0
    %325 = vmatpush.bf16.msra.mxu0 0
    %326 = vmatpush.bf16.msra.mxu0 0
    %327 = vmatpush.bf16.msra.mxu0 0
    %328 = vmatpush.bf16.msra.mxu0 0
    %329 = vmatpush.bf16.msra.mxu0 0
    %330 = vmatpush.bf16.msra.mxu0 0
    %331 = vmatpush.bf16.msra.mxu0 %v322
    %332 = vmatmul.bf16.gmra.mxu0 %v319
    %v333 = vpop.f32.mrf.mxu0
    %v334 = vadd.f32 0.0, %v333
    %v335 = vpop.f32.mrf.mxu0
    %336 = vdwg.mxu0
    %v337 = vpack.c.bf16 %v334, %v334
    %v342 = vunpack.c.l.b16 %v183
    %v343 = vunpack.c.l.b16 %v184
    %v344 = vunpack.c.l.b16 %v185
    %v345 = vunpack.c.l.b16 %v186
    %v346 = vpack.c.b16 %v343, %v342
    %v347 = vpack.c.b16 %v345, %v344
    %348 = vrot.lane.b32.xlu0 %v346, 120
    %v349 = vpop.permute.xlu0 %348
    %350 = vrot.lane.b32.xlu0 %v347, 120
    %v351 = vpop.permute.xlu0 %350
    %v353 = vsel %vm194, %v337, 0
    %v356 = vsel %vm194, %v349, 0
    %v359 = vsel %vm194, %v351, 0
    %361 = vmatpush.bf16.xpose.msra.mxu0 0
    %362 = vmatpush.bf16.xpose.msra.mxu0 0
    %363 = vmatpush.bf16.xpose.msra.mxu0 0
    %364 = vmatpush.bf16.xpose.msra.mxu0 0
    %365 = vmatpush.bf16.xpose.msra.mxu0 0
    %366 = vmatpush.bf16.xpose.msra.mxu0 0
    %367 = vmatpush.bf16.xpose.msra.mxu0 %v359
    %368 = vmatpush.bf16.xpose.msra.mxu0 %v356
    %369 = vmatmul.bf16.gmra.mxu0 %v353
    %v370 = vpop.f32.mrf.mxu0
    %v371 = vadd.f32 0.0, %v370
    %v372 = vpop.f32.mrf.mxu0
    %373 = vdwg.mxu0
    %v375 = vsel %vm194, %v261, 0
    %v378 = vsel %vm194, %v346, 0
    %v381 = vsel %vm194, %v347, 0
    %383 = vmatpush.bf16.xpose.msra.mxu0 0
    %384 = vmatpush.bf16.xpose.msra.mxu0 0
    %385 = vmatpush.bf16.xpose.msra.mxu0 0
    %386 = vmatpush.bf16.xpose.msra.mxu0 0
    %387 = vmatpush.bf16.xpose.msra.mxu0 0
    %388 = vmatpush.bf16.xpose.msra.mxu0 0
    %389 = vmatpush.bf16.xpose.msra.mxu0 %v381
    %390 = vmatpush.bf16.xpose.msra.mxu0 %v378
    %391 = vmatmul.bf16.gmra.mxu0 %v375
    %v392 = vpop.f32.mrf.mxu0
    %v393 = vadd.f32 %v371, %v392
    %v394 = vpop.f32.mrf.mxu0
    %395 = vdwg.mxu0
    %s396 = scalar_lea.vmem [#allocation5], 8
    %v397 = vld [vmem:[%s396] sm:$0xf]
    %v398 = vunpack.c.l.bf16 %v397
    %399 = vrot.lane.b32.xlu0 %v267, 112
    %v400 = vpop.permute.xlu0 %399
    %401 = vrot.lane.b32.xlu0 %v191, 80
    %v402 = vpop.permute.xlu0 %401
    %v404 = vsel %vm194, %v400, 0
    %v407 = vsel %vm194, %v402, 0
    %409 = vmatpush.bf16.xpose.msra.mxu0 0
    %410 = vmatpush.bf16.xpose.msra.mxu0 0
    %411 = vmatpush.bf16.xpose.msra.mxu0 0
    %412 = vmatpush.bf16.xpose.msra.mxu0 0
    %413 = vmatpush.bf16.xpose.msra.mxu0 0
    %414 = vmatpush.bf16.xpose.msra.mxu0 0
    %415 = vmatpush.bf16.xpose.msra.mxu0 0
    %416 = vmatpush.bf16.xpose.msra.mxu0 %v407
    %417 = vmatmul.bf16.gmra.mxu0 %v404
    %v418 = vpop.f32.mrf.mxu0
    %v419 = vadd.f32 %v398, %v418
    %v420 = vpop.f32.mrf.mxu0
    %421 = vdwg.mxu0
    %v422 = vsel %vm194, %v419, -inf
    %423 = vmax.xlane.f32.xlu0 %v422
    %v424 = vpop.xlane.xlu0 %423
    %v425 = vsub.f32 %v419, %v424
    %v426 = vmul.f32 %v425, 1.442695
    %v427 = vpow.pop %v426
    %v428 = vsel %vm194, %v427, 0.0
    %429 = vadd.xlane.f32.xlu0 %v428
    %v430 = vpop.xlane.xlu0 %429
    %v431 = vrcp.pop %v430
    %v432 = vmul.f32 %v430, %v431
    %v433 = vsub.f32 1.0, %v432
    %v434 = vmul.f32 %v431, %v433
    %v435 = vadd.f32 %v431, %v434
    %vm436 = vweird.f32 %v430
    %vm437 = vweird.f32 %v431
    %vm438 = vmor %vm436, %vm437
    %v439 = vsel %vm438, %v431, %v435
    %v440 = vand.u32 2147483647, %v430
    %vm441 = vcmp.eq.f32.partialorder %v440, 8.507059e+37
    %v442 = vand.u32 %v430, 2147483648
    %v443 = vor.u32 1.1754944e-38, %v442
    %v444 = vsel %vm441, %v443, %v439
    %v445 = vmul.f32 %v427, %v444
    %v446 = vpack.c.bf16 %v445, %v445
    %447 = vrot.lane.b32.xlu0 %v191, 48
    %v448 = vpop.permute.xlu0 %447
    %v450 = vsel %vm194, %v446, 0
    %v453 = vsel %vm244, %v448, 0
    %455 = vmatpush.bf16.msra.mxu0 0
    %456 = vmatpush.bf16.msra.mxu0 0
    %457 = vmatpush.bf16.msra.mxu0 0
    %458 = vmatpush.bf16.msra.mxu0 0
    %459 = vmatpush.bf16.msra.mxu0 0
    %460 = vmatpush.bf16.msra.mxu0 0
    %461 = vmatpush.bf16.msra.mxu0 0
    %462 = vmatpush.bf16.msra.mxu0 %v453
    %463 = vmatmul.bf16.gmra.mxu0 %v450
    %v464 = vpop.f32.mrf.mxu0
    %v465 = vadd.f32 0.0, %v464
    %v466 = vpop.f32.mrf.mxu0
    %467 = vdwg.mxu0
    %v468 = vpack.c.bf16 %v465, %v465
    %469 = vrot.lane.b32.xlu0 %v346, 112
    %v470 = vpop.permute.xlu0 %469
    %471 = vrot.lane.b32.xlu0 %v347, 112
    %v472 = vpop.permute.xlu0 %471
    %v474 = vsel %vm194, %v468, 0
    %v477 = vsel %vm194, %v470, 0
    %v480 = vsel %vm194, %v472, 0
    %482 = vmatpush.bf16.xpose.msra.mxu0 0
    %483 = vmatpush.bf16.xpose.msra.mxu0 0
    %484 = vmatpush.bf16.xpose.msra.mxu0 0
    %485 = vmatpush.bf16.xpose.msra.mxu0 0
    %486 = vmatpush.bf16.xpose.msra.mxu0 0
    %487 = vmatpush.bf16.xpose.msra.mxu0 0
    %488 = vmatpush.bf16.xpose.msra.mxu0 %v480
    %489 = vmatpush.bf16.xpose.msra.mxu0 %v477
    %490 = vmatmul.bf16.gmra.mxu0 %v474
    %v491 = vpop.f32.mrf.mxu0
    %v492 = vadd.f32 0.0, %v491
    %v493 = vpop.f32.mrf.mxu0
    %494 = vdwg.mxu0
    %v495 = vadd.f32 %v393, %v492
    %s496 = scalar_lea.vmem [#allocation5], 12
    %v497 = vld [vmem:[%s496] sm:$0xf]
    %v498 = vunpack.c.l.bf16 %v497
    %499 = vrot.lane.b32.xlu0 %v267, 104
    %v500 = vpop.permute.xlu0 %499
    %501 = vrot.lane.b32.xlu0 %v191, 72
    %v502 = vpop.permute.xlu0 %501
    %v504 = vsel %vm194, %v500, 0
    %v507 = vsel %vm194, %v502, 0
    %509 = vmatpush.bf16.xpose.msra.mxu0 0
    %510 = vmatpush.bf16.xpose.msra.mxu0 0
    %511 = vmatpush.bf16.xpose.msra.mxu0 0
    %512 = vmatpush.bf16.xpose.msra.mxu0 0
    %513 = vmatpush.bf16.xpose.msra.mxu0 0
    %514 = vmatpush.bf16.xpose.msra.mxu0 0
    %515 = vmatpush.bf16.xpose.msra.mxu0 0
    %516 = vmatpush.bf16.xpose.msra.mxu0 %v507
    %517 = vmatmul.bf16.gmra.mxu0 %v504
    %v518 = vpop.f32.mrf.mxu0
    %v519 = vadd.f32 %v498, %v518
    %v520 = vpop.f32.mrf.mxu0
    %521 = vdwg.mxu0
    %v522 = vsel %vm194, %v519, -inf
    %523 = vmax.xlane.f32.xlu0 %v522
    %v524 = vpop.xlane.xlu0 %523
    %v525 = vsub.f32 %v519, %v524
    %v526 = vmul.f32 %v525, 1.442695
    %v527 = vpow.pop %v526
    %v528 = vsel %vm194, %v527, 0.0
    %529 = vadd.xlane.f32.xlu0 %v528
    %v530 = vpop.xlane.xlu0 %529
    %v531 = vrcp.pop %v530
    %v532 = vmul.f32 %v530, %v531
    %v533 = vsub.f32 1.0, %v532
    %v534 = vmul.f32 %v531, %v533
    %v535 = vadd.f32 %v531, %v534
    %vm536 = vweird.f32 %v530
    %vm537 = vweird.f32 %v531
    %vm538 = vmor %vm536, %vm537
    %v539 = vsel %vm538, %v531, %v535
    %v540 = vand.u32 2147483647, %v530
    %vm541 = vcmp.eq.f32.partialorder %v540, 8.507059e+37
    %v542 = vand.u32 %v530, 2147483648
    %v543 = vor.u32 1.1754944e-38, %v542
    %v544 = vsel %vm541, %v543, %v539
    %v545 = vmul.f32 %v527, %v544
    %v546 = vpack.c.bf16 %v545, %v545
    %547 = vrot.lane.b32.xlu0 %v191, 40
    %v548 = vpop.permute.xlu0 %547
    %v550 = vsel %vm194, %v546, 0
    %v553 = vsel %vm244, %v548, 0
    %555 = vmatpush.bf16.msra.mxu0 0
    %556 = vmatpush.bf16.msra.mxu0 0
    %557 = vmatpush.bf16.msra.mxu0 0
    %558 = vmatpush.bf16.msra.mxu0 0
    %559 = vmatpush.bf16.msra.mxu0 0
    %560 = vmatpush.bf16.msra.mxu0 0
    %561 = vmatpush.bf16.msra.mxu0 0
    %562 = vmatpush.bf16.msra.mxu0 %v553
    %563 = vmatmul.bf16.gmra.mxu0 %v550
    %v564 = vpop.f32.mrf.mxu0
    %v565 = vadd.f32 0.0, %v564
    %v566 = vpop.f32.mrf.mxu0
    %567 = vdwg.mxu0
    %v568 = vpack.c.bf16 %v565, %v565
    %569 = vrot.lane.b32.xlu0 %v346, 104
    %v570 = vpop.permute.xlu0 %569
    %571 = vrot.lane.b32.xlu0 %v347, 104
    %v572 = vpop.permute.xlu0 %571
    %v574 = vsel %vm194, %v568, 0
    %v577 = vsel %vm194, %v570, 0
    %v580 = vsel %vm194, %v572, 0
    %582 = vmatpush.bf16.xpose.msra.mxu0 0
    %583 = vmatpush.bf16.xpose.msra.mxu0 0
    %584 = vmatpush.bf16.xpose.msra.mxu0 0
    %585 = vmatpush.bf16.xpose.msra.mxu0 0
    %586 = vmatpush.bf16.xpose.msra.mxu0 0
    %587 = vmatpush.bf16.xpose.msra.mxu0 0
    %588 = vmatpush.bf16.xpose.msra.mxu0 %v580
    %589 = vmatpush.bf16.xpose.msra.mxu0 %v577
    %590 = vmatmul.bf16.gmra.mxu0 %v574
    %v591 = vpop.f32.mrf.mxu0
    %v592 = vadd.f32 0.0, %v591
    %v593 = vpop.f32.mrf.mxu0
    %594 = vdwg.mxu0
    %v595 = vadd.f32 %v495, %v592
    %v596 = vld [vmem:[%s5] sm:$0x1]
    %v598 = vperm.slane %v596, 0
    %v600 = vadd.f32 %v595, %v598
    %vm601 = vcmask 261120
    %602 = vst.msk [vmem:[#allocation10] sm:$0xff] %vm601, %v600
    %s603 = scalar_lea.vmem [#allocation5], 16
    %v604 = vld [vmem:[%s603] sm:$0xf]
    %v605 = vunpack.c.l.bf16 %v604
    %v607 = vunpack.c.l.b16 %v182
    %v608 = vpack.c.b16 %v607, %v607
    %609 = vrot.lane.b32.xlu0 %v608, 96
    %v610 = vpop.permute.xlu0 %609
    %v612 = vsel %vm194, %v180, 0
    %v615 = vsel %vm194, %v610, 0
    %617 = vmatpush.bf16.xpose.msra.mxu0 0
    %618 = vmatpush.bf16.xpose.msra.mxu0 0
    %619 = vmatpush.bf16.xpose.msra.mxu0 0
    %620 = vmatpush.bf16.xpose.msra.mxu0 0
    %621 = vmatpush.bf16.xpose.msra.mxu0 0
    %622 = vmatpush.bf16.xpose.msra.mxu0 0
    %623 = vmatpush.bf16.xpose.msra.mxu0 0
    %624 = vmatpush.bf16.xpose.msra.mxu0 %v615
    %625 = vmatmul.bf16.gmra.mxu0 %v612
    %v626 = vpop.f32.mrf.mxu0
    %v627 = vadd.f32 %v605, %v626
    %v628 = vpop.f32.mrf.mxu0
    %629 = vdwg.mxu0
    %v630 = vsel %vm194, %v627, -inf
    %631 = vmax.xlane.f32.xlu0 %v630
    %v632 = vpop.xlane.xlu0 %631
    %v633 = vsub.f32 %v627, %v632
    %v634 = vmul.f32 %v633, 1.442695
    %v635 = vpow.pop %v634
    %v636 = vsel %vm194, %v635, 0.0
    %637 = vadd.xlane.f32.xlu0 %v636
    %v638 = vpop.xlane.xlu0 %637
    %v639 = vrcp.pop %v638
    %v640 = vmul.f32 %v638, %v639
    %v641 = vsub.f32 1.0, %v640
    %v642 = vmul.f32 %v639, %v641
    %v643 = vadd.f32 %v639, %v642
    %vm644 = vweird.f32 %v638
    %vm645 = vweird.f32 %v639
    %vm646 = vmor %vm644, %vm645
    %v647 = vsel %vm646, %v639, %v643
    %v648 = vand.u32 2147483647, %v638
    %vm649 = vcmp.eq.f32.partialorder %v648, 8.507059e+37
    %v650 = vand.u32 %v638, 2147483648
    %v651 = vor.u32 1.1754944e-38, %v650
    %v652 = vsel %vm649, %v651, %v647
    %v653 = vmul.f32 %v635, %v652
    %v654 = vpack.c.bf16 %v653, %v653
    %655 = vrot.lane.b32.xlu0 %v608, 64
    %v656 = vpop.permute.xlu0 %655
    %v658 = vsel %vm194, %v654, 0
    %v661 = vsel %vm244, %v656, 0
    %663 = vmatpush.bf16.msra.mxu0 0
    %664 = vmatpush.bf16.msra.mxu0 0
    %665 = vmatpush.bf16.msra.mxu0 0
    %666 = vmatpush.bf16.msra.mxu0 0
    %667 = vmatpush.bf16.msra.mxu0 0
    %668 = vmatpush.bf16.msra.mxu0 0
    %669 = vmatpush.bf16.msra.mxu0 0
    %670 = vmatpush.bf16.msra.mxu0 %v661
    %671 = vmatmul.bf16.gmra.mxu0 %v658
    %v672 = vpop.f32.mrf.mxu0
    %v673 = vadd.f32 0.0, %v672
    %v674 = vpop.f32.mrf.mxu0
    %675 = vdwg.mxu0
    %v676 = vpack.c.bf16 %v673, %v673
    %s677 = scalar_lea.vmem [#allocation5], 20
    %v678 = vld [vmem:[%s677] sm:$0xf]
    %v679 = vunpack.c.l.bf16 %v678
    %v681 = vunpack.c.l.b16 %v180
    %v682 = vpack.c.b16 %v681, %v681
    %683 = vrot.lane.b32.xlu0 %v682, 120
    %v684 = vpop.permute.xlu0 %683
    %685 = vrot.lane.b32.xlu0 %v608, 88
    %v686 = vpop.permute.xlu0 %685
    %v688 = vsel %vm194, %v684, 0
    %v691 = vsel %vm194, %v686, 0
    %693 = vmatpush.bf16.xpose.msra.mxu0 0
    %694 = vmatpush.bf16.xpose.msra.mxu0 0
    %695 = vmatpush.bf16.xpose.msra.mxu0 0
    %696 = vmatpush.bf16.xpose.msra.mxu0 0
    %697 = vmatpush.bf16.xpose.msra.mxu0 0
    %698 = vmatpush.bf16.xpose.msra.mxu0 0
    %699 = vmatpush.bf16.xpose.msra.mxu0 0
    %700 = vmatpush.bf16.xpose.msra.mxu0 %v691
    %701 = vmatmul.bf16.gmra.mxu0 %v688
    %v702 = vpop.f32.mrf.mxu0
    %v703 = vadd.f32 %v679, %v702
    %v704 = vpop.f32.mrf.mxu0
    %705 = vdwg.mxu0
    %v706 = vsel %vm194, %v703, -inf
    %707 = vmax.xlane.f32.xlu0 %v706
    %v708 = vpop.xlane.xlu0 %707
    %v709 = vsub.f32 %v703, %v708
    %v710 = vmul.f32 %v709, 1.442695
    %v711 = vpow.pop %v710
    %v712 = vsel %vm194, %v711, 0.0
    %713 = vadd.xlane.f32.xlu0 %v712
    %v714 = vpop.xlane.xlu0 %713
    %v715 = vrcp.pop %v714
    %v716 = vmul.f32 %v714, %v715
    %v717 = vsub.f32 1.0, %v716
    %v718 = vmul.f32 %v715, %v717
    %v719 = vadd.f32 %v715, %v718
    %vm720 = vweird.f32 %v714
    %vm721 = vweird.f32 %v715
    %vm722 = vmor %vm720, %vm721
    %v723 = vsel %vm722, %v715, %v719
    %v724 = vand.u32 2147483647, %v714
    %vm725 = vcmp.eq.f32.partialorder %v724, 8.507059e+37
    %v726 = vand.u32 %v714, 2147483648
    %v727 = vor.u32 1.1754944e-38, %v726
    %v728 = vsel %vm725, %v727, %v723
    %v729 = vmul.f32 %v711, %v728
    %v730 = vpack.c.bf16 %v729, %v729
    %731 = vrot.lane.b32.xlu0 %v608, 56
    %v732 = vpop.permute.xlu0 %731
    %v734 = vsel %vm194, %v730, 0
    %v737 = vsel %vm244, %v732, 0
    %739 = vmatpush.bf16.msra.mxu0 0
    %740 = vmatpush.bf16.msra.mxu0 0
    %741 = vmatpush.bf16.msra.mxu0 0
    %742 = vmatpush.bf16.msra.mxu0 0
    %743 = vmatpush.bf16.msra.mxu0 0
    %744 = vmatpush.bf16.msra.mxu0 0
    %745 = vmatpush.bf16.msra.mxu0 0
    %746 = vmatpush.bf16.msra.mxu0 %v737
    %747 = vmatmul.bf16.gmra.mxu0 %v734
    %v748 = vpop.f32.mrf.mxu0
    %v749 = vadd.f32 0.0, %v748
    %v750 = vpop.f32.mrf.mxu0
    %751 = vdwg.mxu0
    %v752 = vpack.c.bf16 %v749, %v749
    %v754 = vsel %vm194, %v752, 0
    %756 = vmatpush.bf16.xpose.msra.mxu0 0
    %757 = vmatpush.bf16.xpose.msra.mxu0 0
    %758 = vmatpush.bf16.xpose.msra.mxu0 0
    %759 = vmatpush.bf16.xpose.msra.mxu0 0
    %760 = vmatpush.bf16.xpose.msra.mxu0 0
    %761 = vmatpush.bf16.xpose.msra.mxu0 0
    %762 = vmatpush.bf16.xpose.msra.mxu0 %v359
    %763 = vmatpush.bf16.xpose.msra.mxu0 %v356
    %764 = vmatmul.bf16.gmra.mxu0 %v754
    %v765 = vpop.f32.mrf.mxu0
    %v766 = vadd.f32 0.0, %v765
    %v767 = vpop.f32.mrf.mxu0
    %768 = vdwg.mxu0
    %v770 = vsel %vm194, %v676, 0
    %772 = vmatpush.bf16.xpose.msra.mxu0 0
    %773 = vmatpush.bf16.xpose.msra.mxu0 0
    %774 = vmatpush.bf16.xpose.msra.mxu0 0
    %775 = vmatpush.bf16.xpose.msra.mxu0 0
    %776 = vmatpush.bf16.xpose.msra.mxu0 0
    %777 = vmatpush.bf16.xpose.msra.mxu0 0
    %778 = vmatpush.bf16.xpose.msra.mxu0 %v381
    %779 = vmatpush.bf16.xpose.msra.mxu0 %v378
    %780 = vmatmul.bf16.gmra.mxu0 %v770
    %v781 = vpop.f32.mrf.mxu0
    %v782 = vadd.f32 %v766, %v781
    %v783 = vpop.f32.mrf.mxu0
    %784 = vdwg.mxu0
    %s785 = scalar_lea.vmem [#allocation5], 24
    %v786 = vld [vmem:[%s785] sm:$0xf]
    %v787 = vunpack.c.l.bf16 %v786
    %788 = vrot.lane.b32.xlu0 %v682, 112
    %v789 = vpop.permute.xlu0 %788
    %790 = vrot.lane.b32.xlu0 %v608, 80
    %v791 = vpop.permute.xlu0 %790
    %v793 = vsel %vm194, %v789, 0
    %v796 = vsel %vm194, %v791, 0
    %798 = vmatpush.bf16.xpose.msra.mxu0 0
    %799 = vmatpush.bf16.xpose.msra.mxu0 0
    %800 = vmatpush.bf16.xpose.msra.mxu0 0
    %801 = vmatpush.bf16.xpose.msra.mxu0 0
    %802 = vmatpush.bf16.xpose.msra.mxu0 0
    %803 = vmatpush.bf16.xpose.msra.mxu0 0
    %804 = vmatpush.bf16.xpose.msra.mxu0 0
    %805 = vmatpush.bf16.xpose.msra.mxu0 %v796
    %806 = vmatmul.bf16.gmra.mxu0 %v793
    %v807 = vpop.f32.mrf.mxu0
    %v808 = vadd.f32 %v787, %v807
    %v809 = vpop.f32.mrf.mxu0
    %810 = vdwg.mxu0
    %v811 = vsel %vm194, %v808, -inf
    %812 = vmax.xlane.f32.xlu0 %v811
    %v813 = vpop.xlane.xlu0 %812
    %v814 = vsub.f32 %v808, %v813
    %v815 = vmul.f32 %v814, 1.442695
    %v816 = vpow.pop %v815
    %v817 = vsel %vm194, %v816, 0.0
    %818 = vadd.xlane.f32.xlu0 %v817
    %v819 = vpop.xlane.xlu0 %818
    %v820 = vrcp.pop %v819
    %v821 = vmul.f32 %v819, %v820
    %v822 = vsub.f32 1.0, %v821
    %v823 = vmul.f32 %v820, %v822
    %v824 = vadd.f32 %v820, %v823
    %vm825 = vweird.f32 %v819
    %vm826 = vweird.f32 %v820
    %vm827 = vmor %vm825, %vm826
    %v828 = vsel %vm827, %v820, %v824
    %v829 = vand.u32 2147483647, %v819
    %vm830 = vcmp.eq.f32.partialorder %v829, 8.507059e+37
    %v831 = vand.u32 %v819, 2147483648
    %v832 = vor.u32 1.1754944e-38, %v831
    %v833 = vsel %vm830, %v832, %v828
    %v834 = vmul.f32 %v816, %v833
    %v835 = vpack.c.bf16 %v834, %v834
    %836 = vrot.lane.b32.xlu0 %v608, 48
    %v837 = vpop.permute.xlu0 %836
    %v839 = vsel %vm194, %v835, 0
    %v842 = vsel %vm244, %v837, 0
    %844 = vmatpush.bf16.msra.mxu0 0
    %845 = vmatpush.bf16.msra.mxu0 0
    %846 = vmatpush.bf16.msra.mxu0 0
    %847 = vmatpush.bf16.msra.mxu0 0
    %848 = vmatpush.bf16.msra.mxu0 0
    %849 = vmatpush.bf16.msra.mxu0 0
    %850 = vmatpush.bf16.msra.mxu0 0
    %851 = vmatpush.bf16.msra.mxu0 %v842
    %852 = vmatmul.bf16.gmra.mxu0 %v839
    %v853 = vpop.f32.mrf.mxu0
    %v854 = vadd.f32 0.0, %v853
    %v855 = vpop.f32.mrf.mxu0
    %856 = vdwg.mxu0
    %v857 = vpack.c.bf16 %v854, %v854
    %v859 = vsel %vm194, %v857, 0
    %861 = vmatpush.bf16.xpose.msra.mxu0 0
    %862 = vmatpush.bf16.xpose.msra.mxu0 0
    %863 = vmatpush.bf16.xpose.msra.mxu0 0
    %864 = vmatpush.bf16.xpose.msra.mxu0 0
    %865 = vmatpush.bf16.xpose.msra.mxu0 0
    %866 = vmatpush.bf16.xpose.msra.mxu0 0
    %867 = vmatpush.bf16.xpose.msra.mxu0 %v480
    %868 = vmatpush.bf16.xpose.msra.mxu0 %v477
    %869 = vmatmul.bf16.gmra.mxu0 %v859
    %v870 = vpop.f32.mrf.mxu0
    %v871 = vadd.f32 0.0, %v870
    %v872 = vpop.f32.mrf.mxu0
    %873 = vdwg.mxu0
    %v874 = vadd.f32 %v782, %v871
    %s875 = scalar_lea.vmem [#allocation5], 28
    %v876 = vld [vmem:[%s875] sm:$0xf]
    %v877 = vunpack.c.l.bf16 %v876
    %878 = vrot.lane.b32.xlu0 %v682, 104
    %v879 = vpop.permute.xlu0 %878
    %880 = vrot.lane.b32.xlu0 %v608, 72
    %v881 = vpop.permute.xlu0 %880
    %v883 = vsel %vm194, %v879, 0
    %v886 = vsel %vm194, %v881, 0
    %888 = vmatpush.bf16.xpose.msra.mxu0 0
    %889 = vmatpush.bf16.xpose.msra.mxu0 0
    %890 = vmatpush.bf16.xpose.msra.mxu0 0
    %891 = vmatpush.bf16.xpose.msra.mxu0 0
    %892 = vmatpush.bf16.xpose.msra.mxu0 0
    %893 = vmatpush.bf16.xpose.msra.mxu0 0
    %894 = vmatpush.bf16.xpose.msra.mxu0 0
    %895 = vmatpush.bf16.xpose.msra.mxu0 %v886
    %896 = vmatmul.bf16.gmra.mxu0 %v883
    %v897 = vpop.f32.mrf.mxu0
    %v898 = vadd.f32 %v877, %v897
    %v899 = vpop.f32.mrf.mxu0
    %900 = vdwg.mxu0
    %v901 = vsel %vm194, %v898, -inf
    %902 = vmax.xlane.f32.xlu0 %v901
    %v903 = vpop.xlane.xlu0 %902
    %v904 = vsub.f32 %v898, %v903
    %v905 = vmul.f32 %v904, 1.442695
    %v906 = vpow.pop %v905
    %v907 = vsel %vm194, %v906, 0.0
    %908 = vadd.xlane.f32.xlu0 %v907
    %v909 = vpop.xlane.xlu0 %908
    %v910 = vrcp.pop %v909
    %v911 = vmul.f32 %v909, %v910
    %v912 = vsub.f32 1.0, %v911
    %v913 = vmul.f32 %v910, %v912
    %v914 = vadd.f32 %v910, %v913
    %vm915 = vweird.f32 %v909
    %vm916 = vweird.f32 %v910
    %vm917 = vmor %vm915, %vm916
    %v918 = vsel %vm917, %v910, %v914
    %v919 = vand.u32 2147483647, %v909
    %vm920 = vcmp.eq.f32.partialorder %v919, 8.507059e+37
    %v921 = vand.u32 %v909, 2147483648
    %v922 = vor.u32 1.1754944e-38, %v921
    %v923 = vsel %vm920, %v922, %v918
    %v924 = vmul.f32 %v906, %v923
    %v925 = vpack.c.bf16 %v924, %v924
    %926 = vrot.lane.b32.xlu0 %v608, 40
    %v927 = vpop.permute.xlu0 %926
    %v929 = vsel %vm194, %v925, 0
    %v932 = vsel %vm244, %v927, 0
    %934 = vmatpush.bf16.msra.mxu0 0
    %935 = vmatpush.bf16.msra.mxu0 0
    %936 = vmatpush.bf16.msra.mxu0 0
    %937 = vmatpush.bf16.msra.mxu0 0
    %938 = vmatpush.bf16.msra.mxu0 0
    %939 = vmatpush.bf16.msra.mxu0 0
    %940 = vmatpush.bf16.msra.mxu0 0
    %941 = vmatpush.bf16.msra.mxu0 %v932
    %942 = vmatmul.bf16.gmra.mxu0 %v929
    %v943 = vpop.f32.mrf.mxu0
    %v944 = vadd.f32 0.0, %v943
    %v945 = vpop.f32.mrf.mxu0
    %946 = vdwg.mxu0
    %v947 = vpack.c.bf16 %v944, %v944
    %v949 = vsel %vm194, %v947, 0
    %951 = vmatpush.bf16.xpose.msra.mxu0 0
    %952 = vmatpush.bf16.xpose.msra.mxu0 0
    %953 = vmatpush.bf16.xpose.msra.mxu0 0
    %954 = vmatpush.bf16.xpose.msra.mxu0 0
    %955 = vmatpush.bf16.xpose.msra.mxu0 0
    %956 = vmatpush.bf16.xpose.msra.mxu0 0
    %957 = vmatpush.bf16.xpose.msra.mxu0 %v580
    %958 = vmatpush.bf16.xpose.msra.mxu0 %v577
    %959 = vmatmul.bf16.gmra.mxu0 %v949
    %v960 = vpop.f32.mrf.mxu0
    %v961 = vadd.f32 0.0, %v960
    %v962 = vpop.f32.mrf.mxu0
    %963 = vdwg.mxu0
    %v964 = vadd.f32 %v874, %v961
    %v965 = vld [vmem:[%s5] sm:$0x1]
    %v967 = vperm.slane %v965, 0
    %v969 = vadd.f32 %v964, %v967
    %970 = vst.msk [vmem:[#allocation10 + $0x8] sm:$0xff] %vm601, %v969
    // Predicated region
    $region42: #{tpu_custom_call.1} parent=1 // pred_check
      _
    $region43: #{tpu_custom_call.1} parent=1 // pred_check_branch
      %972 = sbr.rel (0) target = $region45
    $region44: #{tpu_custom_call.1} parent=1 // pred_region
      %974 = vsyncadd [#allocation4], 0
      %s975 = sshll.u32 [#allocation10], 4
      %s976 = int_to_ptr.vmem [resolvable:$true] %s975
      %s977 = sshll.u32 %s6, 4
      %s978 = int_to_ptr.hbm [resolvable:$true] %s977
      %983 = dma.vmem_to_hbm [thread:$0]  %s976, 256, %s978, [#allocation4], 128, 128, 8
    $region45: #{tpu_custom_call.1} parent=1 // pred_fallthru
      _
    // Predicated region
    $region46: #{tpu_custom_call.1} parent=1 // pred_check
      _
    $region47: #{tpu_custom_call.1} parent=1 // pred_check_branch
      %985 = sbr.rel (0) target = $region49
    $region48: #{tpu_custom_call.1} parent=1 // pred_region
      %987 = dma.done [#allocation4], 256
    $region49: #{tpu_custom_call.1} parent=1 // pred_fallthru
      _
    %988 = vsyncpa [#allocation3], 1
    %989 = vsyncpa [#allocation6], 1
    %990 = vsyncpa [#allocation9], 1
    %991 = vsyncpa [#allocation4], 1

</llo_original>
